<compile_context>
chip_gen: v7x
topology: tpu7x:2x2x1
jax: 0.10.0
libtpu: 0.0.40
codegen_flags: <defaults>
</compile_context>

<pallas_src>
import jax
import jax.numpy as jnp
from jax.experimental import pallas as pl
from jax.experimental.pallas import tpu as pltpu


def _round_up(v, m):
    return ((v + m - 1) // m) * m


def _attention_block_kernel(g_ref, x_ref, w1_ref, b1_ref, wpsi_ref,
                            wa_ref, ba_ref, wb_ref, bpsi_ref, out_ref):
    # g_ref: (1, F_l, TP) f32, x_ref: (1, F_g, TP) f32 -- pixels lane-dense.
    x = x_ref[0]                                           # (F_g, TP) f32, reused for gating

    # Fused stage-1: h = relu([Wg^T | Wx^T] @ [g; x] + (bg + bx)).
    # Single bf16 MXU pass (K = F_l + F_g = 16 fills a packed bf16 sublane group).
    gx = jnp.concatenate([g_ref[0], x], axis=0).astype(jnp.bfloat16)     # (F_l+F_g, TP)
    h = jnp.dot(w1_ref[...], gx, preferred_element_type=jnp.float32)     # (F_int, TP) f32
    h = jnp.maximum(h + b1_ref[...], 0.0)

    # psi = sigmoid(wpsi . h + bpsi): VPU multiply + sublane reduce (no 1-row matmul).
    psi = jax.nn.sigmoid(
        jnp.sum(h * wpsi_ref[...], axis=0, keepdims=True) + bpsi_ref[0])  # (1, TP)

    # TP-LoRA adapter branch on x: bf16 MXU operands, f32 accumulation.
    x_bf = gx[wa_ref.shape[1]:, :]                          # reuse bf16 x rows (F_g, TP)
    down = jnp.maximum(
        jnp.dot(wa_ref[...], x_bf, preferred_element_type=jnp.float32) + ba_ref[...],
        0.0)                                                # (rank_pad, TP) f32
    adapter = jnp.dot(wb_ref[...], down.astype(jnp.bfloat16),
                      preferred_element_type=jnp.float32)   # (F_g, TP) f32

    # out = x * psi + adapter(x), all f32, lane-dense unmasked store.
    out_ref[0] = (x * psi + adapter).astype(out_ref.dtype)


def attention_block_forward(g, x, params, *, tile_p=16384):
    """g: (N, F_l, H, W), x: (N, F_g, H, W) float32 NCHW.  Returns (N, F_g, H, W) f32."""
    N, F_l, H, W = g.shape
    Nx, F_g, Hx, Wx = x.shape
    assert (N, H, W) == (Nx, Hx, Wx)
    HW = H * W

    # ---- small parameters: separate, lane-aligned, grid-resident blocks ----
    F_int = params["wg"].shape[1]
    # fused stage-1 weight [Wg^T | Wx^T], bf16 for the MXU; biases stay f32.
    w1 = jnp.concatenate([params["wg"].T, params["wx"].T], axis=1).astype(jnp.bfloat16)
    b1 = (params["bg"] + params["bx"]).reshape(F_int, 1).astype(jnp.float32)
    wpsi = params["wpsi"].reshape(F_int, 1).astype(jnp.float32)
    bpsi = params["bpsi"].reshape(1).astype(jnp.float32)            # SMEM scalar

    rank = params["wa"].shape[1]
    rank_pad = _round_up(rank, 8)                                   # sublane-aligned
    wa = jnp.pad(params["wa"].T, ((0, rank_pad - rank), (0, 0))).astype(jnp.bfloat16)
    ba = jnp.pad(params["ba"].reshape(rank, 1),
                 ((0, rank_pad - rank), (0, 0))).astype(jnp.float32)
    wb = jnp.pad(params["wb"].T, ((0, 0), (0, rank_pad - rank))).astype(jnp.bfloat16)

    # ---- activations: free NCHW -> (N, C, H*W) reshape, NO cast / NO pad ----
    g3 = g.reshape(N, F_l, HW)
    x3 = x.reshape(N, F_g, HW)

    # Big lane-aligned pixel tile (amortize per-step overhead); ensure the
    # parallel grid product is >= 2 so v7x megacore keeps both TCs busy.
    tile = max(128, min(_round_up(tile_p, 128), _round_up(HW, 128)))
    if N * pl.cdiv(HW, tile) < 2 and HW > 128:
        tile = _round_up(pl.cdiv(HW, 2), 128)
    n_tiles = pl.cdiv(HW, tile)
    grid = (N, n_tiles)

    out3 = pl.pallas_call(
        _attention_block_kernel,
        out_shape=jax.ShapeDtypeStruct((N, F_g, HW), x.dtype),
        grid_spec=pltpu.PrefetchScalarGridSpec(
            num_scalar_prefetch=0,
            grid=grid,
            in_specs=[
                pl.BlockSpec((1, F_l, tile), lambda n, p: (n, 0, p)),   # g tile
                pl.BlockSpec((1, F_g, tile), lambda n, p: (n, 0, p)),   # x tile
                pl.BlockSpec(w1.shape, lambda n, p: (0, 0)),            # fused stage-1 W
                pl.BlockSpec(b1.shape, lambda n, p: (0, 0)),            # fused stage-1 bias
                pl.BlockSpec(wpsi.shape, lambda n, p: (0, 0)),          # psi weight column
                pl.BlockSpec(wa.shape, lambda n, p: (0, 0)),            # adapter down W
                pl.BlockSpec(ba.shape, lambda n, p: (0, 0)),            # adapter text bias
                pl.BlockSpec(wb.shape, lambda n, p: (0, 0)),            # adapter up W
                pl.BlockSpec(memory_space=pltpu.MemorySpace.SMEM),      # psi bias scalar
            ],
            out_specs=pl.BlockSpec((1, F_g, tile), lambda n, p: (n, 0, p)),
        ),
        compiler_params=pltpu.CompilerParams(
            dimension_semantics=("parallel", "parallel"),
            vmem_limit_bytes=32 * 1024 * 1024),
    )(g3, x3, w1, b1, wpsi, wa, ba, wb, bpsi)

    return out3.reshape(N, F_g, H, W)


def _fold_bn(w, b, gamma, beta, mean, var, eps=1e-5):
    """Fold eval-mode BatchNorm into a 1x1 conv expressed as a (C_in, C_out) matmul."""
    s = gamma / jnp.sqrt(var + eps)
    return w * s[None, :], (b - mean) * s + beta


def make_params(key, F_g, F_l, F_int, rank, text_dim, lora_alpha=4.0):
    ks = jax.random.split(key, 16)
    u = lambda k, shape, scale=0.1: scale * jax.random.normal(k, shape, jnp.float32)

    # raw conv weights stored as (C_in, C_out) for the 1x1-conv-as-matmul
    wg_raw, bg_raw = u(ks[0], (F_l, F_int)), u(ks[1], (F_int,))
    wx_raw, bx_raw = u(ks[2], (F_g, F_int)), u(ks[3], (F_int,))
    wpsi_raw, bpsi_raw = u(ks[4], (F_int, 1)), u(ks[5], (1,))

    bn = lambda k, c: (1.0 + 0.1 * jax.random.normal(k, (c,), jnp.float32),      # gamma
                       u(jax.random.fold_in(k, 1), (c,)),                        # beta
                       u(jax.random.fold_in(k, 2), (c,)),                        # running mean
                       1.0 + 0.1 * jax.random.uniform(jax.random.fold_in(k, 3), (c,)))  # var

    wg, bg = _fold_bn(wg_raw, bg_raw, *bn(ks[6], F_int))
    wx, bx = _fold_bn(wx_raw, bx_raw, *bn(ks[7], F_int))
    wpsi, bpsi = _fold_bn(wpsi_raw, bpsi_raw, *bn(ks[8], 1))

    # TP-LoRA adapter: down/up projections + text-vector conditioning
    words_vector = u(ks[9], (text_dim,), scale=1.0)
    w_text = u(ks[10], (text_dim, rank))
    wa = u(ks[11], (F_g, rank))
    ba = words_vector @ w_text                             # (rank,) text bias
    wb = u(ks[12], (rank, F_g)) * (lora_alpha / rank)      # scale folded into up-proj

    return {"wg": wg, "bg": bg, "wx": wx, "bx": bx,
            "wpsi": wpsi, "bpsi": bpsi,
            "wa": wa, "ba": ba, "wb": wb}


if __name__ == "__main__":
    key = jax.random.PRNGKey(0)
    k_g, k_x, k_p = jax.random.split(key, 3)

    N, H, W = 2, 16, 16
    F_g = F_l = 8          # g has F_l channels (fed to W_g), x has F_g channels (fed to W_x)
    F_int = 16
    rank, text_dim = 4, 32

    g = jax.random.normal(k_g, (N, F_l, H, W), jnp.float32)
    x = jax.random.normal(k_x, (N, F_g, H, W), jnp.float32)
    params = make_params(k_p, F_g, F_l, F_int, rank, text_dim)

    out = attention_block_forward(g, x, params)
    jax.block_until_ready(out)

    # reference: same math in plain f32 JAX (no input quantization)
    def ref(g, x, p):
        g2 = jnp.transpose(g, (0, 2, 3, 1)).reshape(-1, F_l)
        x2 = jnp.transpose(x, (0, 2, 3, 1)).reshape(-1, F_g)
        h = jnp.maximum(g2 @ p["wg"] + p["bg"] + x2 @ p["wx"] + p["bx"], 0.0)
        psi = jax.nn.sigmoid(h @ p["wpsi"] + p["bpsi"])
        ad = jnp.maximum(x2 @ p["wa"] + p["ba"], 0.0) @ p["wb"]
        o = x2 * psi + ad
        return jnp.transpose(o.reshape(N, H, W, F_g), (0, 3, 1, 2))

    ref_out = ref(g, x, params)
    assert out.shape == (N, F_g, H, W)
    err = float(jnp.max(jnp.abs(out - ref_out)))
    assert jnp.allclose(out, ref_out, atol=3e-2, rtol=3e-2), "max abs err = %g" % err

    print("KERNEL_OK")
</pallas_src>

<mosaic_0001>
module attributes {stable_mosaic.version = 11 : i64} {
  func.func @_attention_block_kernel(%arg0: i32, %arg1: i32, %arg2: memref<1x8x256xf32, #tpu.memory_space<vmem>>, %arg3: memref<1x8x256xf32, #tpu.memory_space<vmem>>, %arg4: memref<16x16xbf16, #tpu.memory_space<vmem>>, %arg5: memref<16x1xf32, #tpu.memory_space<vmem>>, %arg6: memref<16x1xf32, #tpu.memory_space<vmem>>, %arg7: memref<8x8xbf16, #tpu.memory_space<vmem>>, %arg8: memref<8x1xf32, #tpu.memory_space<vmem>>, %arg9: memref<8x8xbf16, #tpu.memory_space<vmem>>, %arg10: memref<1xf32, #tpu.memory_space<smem>>, %arg11: memref<1x8x256xf32, #tpu.memory_space<vmem>>) attributes {dimension_semantics = [#tpu.dimension_semantics<parallel>, #tpu.dimension_semantics<parallel>], iteration_bounds = array<i64: 2, 1>, scalar_prefetch = 0 : i64, scratch_operands = 0 : i64, tpu.core_type = #tpu.core_type<tc>, window_params = [{transform_indices = @transform_0, window_bounds = array<i64: 1, 8, 256>}, {transform_indices = @transform_1, window_bounds = array<i64: 1, 8, 256>}, {pipeline_mode = #tpu.pipeline_mode<synchronous>, transform_indices = @transform_2, window_bounds = array<i64: 16, 16>}, {pipeline_mode = #tpu.pipeline_mode<synchronous>, transform_indices = @transform_3, window_bounds = array<i64: 16, 1>}, {pipeline_mode = #tpu.pipeline_mode<synchronous>, transform_indices = @transform_4, window_bounds = array<i64: 16, 1>}, {pipeline_mode = #tpu.pipeline_mode<synchronous>, transform_indices = @transform_5, window_bounds = array<i64: 8, 8>}, {pipeline_mode = #tpu.pipeline_mode<synchronous>, transform_indices = @transform_6, window_bounds = array<i64: 8, 1>}, {pipeline_mode = #tpu.pipeline_mode<synchronous>, transform_indices = @transform_7, window_bounds = array<i64: 8, 8>}, {transform_indices = @transform_8, window_bounds = array<i64: 1>}, {transform_indices = @transform_9, window_bounds = array<i64: 1, 8, 256>}]} {
    %c0 = arith.constant 0 : index
    %c0_0 = arith.constant 0 : index
    %c0_1 = arith.constant 0 : index
    %0 = vector.load %arg3[%c0, %c0_0, %c0_1] : memref<1x8x256xf32, #tpu.memory_space<vmem>>, vector<1x8x256xf32>
    %1 = vector.shape_cast %0 : vector<1x8x256xf32> to vector<8x256xf32>
    %c0_2 = arith.constant 0 : index
    %c0_3 = arith.constant 0 : index
    %c0_4 = arith.constant 0 : index
    %2 = vector.load %arg2[%c0_2, %c0_3, %c0_4] : memref<1x8x256xf32, #tpu.memory_space<vmem>>, vector<1x8x256xf32>
    %3 = vector.shape_cast %2 : vector<1x8x256xf32> to vector<8x256xf32>
    %4 = tpu.concatenate %3, %1 in 0 : vector<8x256xf32>, vector<8x256xf32> -> vector<16x256xf32>
    %5 = arith.truncf %4 : vector<16x256xf32> to vector<16x256xbf16>
    %c0_5 = arith.constant 0 : index
    %c0_6 = arith.constant 0 : index
    %6 = vector.load %arg4[%c0_5, %c0_6] : memref<16x16xbf16, #tpu.memory_space<vmem>>, vector<16x16xbf16>
    %cst = arith.constant dense<0.000000e+00> : vector<16x256xf32>
    %7 = tpu.matmul %6, %5, %cst {dimension_numbers = #tpu.dot_dimension_numbers<[1], [0], [0], [1], [0, 0, 1, 1], [], []>} : vector<16x16xbf16>, vector<16x256xbf16>, vector<16x256xf32> -> vector<16x256xf32>
    %c0_7 = arith.constant 0 : index
    %c0_8 = arith.constant 0 : index
    %8 = vector.load %arg5[%c0_7, %c0_8] : memref<16x1xf32, #tpu.memory_space<vmem>>, vector<16x1xf32>
    %9 = vector.broadcast %8 : vector<16x1xf32> to vector<16x256xf32>
    %10 = arith.addf %7, %9 : vector<16x256xf32>
    %cst_9 = arith.constant 0.000000e+00 : f32
    %11 = vector.broadcast %cst_9 : f32 to vector<16x256xf32>
    %12 = arith.maximumf %10, %11 : vector<16x256xf32>
    %c0_10 = arith.constant 0 : index
    %c0_11 = arith.constant 0 : index
    %13 = vector.load %arg6[%c0_10, %c0_11] : memref<16x1xf32, #tpu.memory_space<vmem>>, vector<16x1xf32>
    %14 = vector.broadcast %13 : vector<16x1xf32> to vector<16x256xf32>
    %15 = arith.mulf %12, %14 : vector<16x256xf32>
    %cst_12 = arith.constant dense<0.000000e+00> : vector<256xf32>
    %16 = vector.multi_reduction <add>, %15, %cst_12 [0] : vector<16x256xf32> to vector<256xf32>
    %17 = vector.shape_cast %16 : vector<256xf32> to vector<1x256xf32>
    %c0_13 = arith.constant 0 : index
    %18 = memref.load %arg10[%c0_13] : memref<1xf32, #tpu.memory_space<smem>>
    %19 = vector.broadcast %18 : f32 to vector<1x256xf32>
    %20 = arith.addf %17, %19 : vector<1x256xf32>
    %21 = arith.negf %20 : vector<1x256xf32>
    %22 = math.exp %21 : vector<1x256xf32>
    %cst_14 = arith.constant 1.000000e+00 : f32
    %23 = vector.broadcast %cst_14 : f32 to vector<1x256xf32>
    %24 = arith.addf %23, %22 : vector<1x256xf32>
    %25 = arith.divf %23, %24 : vector<1x256xf32>
    %26 = vector.extract_strided_slice %5 {offsets = [8, 0], sizes = [8, 256], strides = [1, 1]} : vector<16x256xbf16> to vector<8x256xbf16>
    %c0_15 = arith.constant 0 : index
    %c0_16 = arith.constant 0 : index
    %27 = vector.load %arg7[%c0_15, %c0_16] : memref<8x8xbf16, #tpu.memory_space<vmem>>, vector<8x8xbf16>
    %cst_17 = arith.constant dense<0.000000e+00> : vector<8x256xf32>
    %28 = tpu.matmul %27, %26, %cst_17 {dimension_numbers = #tpu.dot_dimension_numbers<[1], [0], [0], [1], [0, 0, 1, 1], [], []>} : vector<8x8xbf16>, vector<8x256xbf16>, vector<8x256xf32> -> vector<8x256xf32>
    %c0_18 = arith.constant 0 : index
    %c0_19 = arith.constant 0 : index
    %29 = vector.load %arg8[%c0_18, %c0_19] : memref<8x1xf32, #tpu.memory_space<vmem>>, vector<8x1xf32>
    %30 = vector.broadcast %29 : vector<8x1xf32> to vector<8x256xf32>
    %31 = arith.addf %28, %30 : vector<8x256xf32>
    %cst_20 = arith.constant 0.000000e+00 : f32
    %32 = vector.broadcast %cst_20 : f32 to vector<8x256xf32>
    %33 = arith.maximumf %31, %32 : vector<8x256xf32>
    %c0_21 = arith.constant 0 : index
    %c0_22 = arith.constant 0 : index
    %34 = vector.load %arg9[%c0_21, %c0_22] : memref<8x8xbf16, #tpu.memory_space<vmem>>, vector<8x8xbf16>
    %35 = arith.truncf %33 : vector<8x256xf32> to vector<8x256xbf16>
    %cst_23 = arith.constant dense<0.000000e+00> : vector<8x256xf32>
    %36 = tpu.matmul %34, %35, %cst_23 {dimension_numbers = #tpu.dot_dimension_numbers<[1], [0], [0], [1], [0, 0, 1, 1], [], []>} : vector<8x8xbf16>, vector<8x256xbf16>, vector<8x256xf32> -> vector<8x256xf32>
    %37 = vector.broadcast %25 : vector<1x256xf32> to vector<8x256xf32>
    %38 = arith.mulf %1, %37 : vector<8x256xf32>
    %39 = arith.addf %38, %36 : vector<8x256xf32>
    %c0_24 = arith.constant 0 : index
    %c0_25 = arith.constant 0 : index
    %c0_26 = arith.constant 0 : index
    %40 = vector.load %arg11[%c0_24, %c0_25, %c0_26] : memref<1x8x256xf32, #tpu.memory_space<vmem>>, vector<1x8x256xf32>
    %41 = vector.shape_cast %40 : vector<1x8x256xf32> to vector<8x256xf32>
    %42 = vector.shape_cast %39 : vector<8x256xf32> to vector<1x8x256xf32>
    tpu.vector_store %arg11[%c0_24, %c0_25, %c0_26], %42 {strides = array<i32>} : memref<1x8x256xf32, #tpu.memory_space<vmem>>, vector<1x8x256xf32>,
    return
  }
  func.func @transform_0(%arg0: i32, %arg1: i32) -> (i32, i32, i32) {
    %c0_i32 = arith.constant 0 : i32
    %c0_i32_0 = arith.constant 0 : i32
    return %arg0, %c0_i32, %arg1 : i32, i32, i32
  }
  func.func @transform_1(%arg0: i32, %arg1: i32) -> (i32, i32, i32) {
    %c0_i32 = arith.constant 0 : i32
    %c0_i32_0 = arith.constant 0 : i32
    return %arg0, %c0_i32, %arg1 : i32, i32, i32
  }
  func.func @transform_2(%arg0: i32, %arg1: i32) -> (i32, i32) {
    %c0_i32 = arith.constant 0 : i32
    %c0_i32_0 = arith.constant 0 : i32
    %c0_i32_1 = arith.constant 0 : i32
    return %c0_i32, %c0_i32_0 : i32, i32
  }
  func.func @transform_3(%arg0: i32, %arg1: i32) -> (i32, i32) {
    %c0_i32 = arith.constant 0 : i32
    %c0_i32_0 = arith.constant 0 : i32
    %c0_i32_1 = arith.constant 0 : i32
    return %c0_i32, %c0_i32_0 : i32, i32
  }
  func.func @transform_4(%arg0: i32, %arg1: i32) -> (i32, i32) {
    %c0_i32 = arith.constant 0 : i32
    %c0_i32_0 = arith.constant 0 : i32
    %c0_i32_1 = arith.constant 0 : i32
    return %c0_i32, %c0_i32_0 : i32, i32
  }
  func.func @transform_5(%arg0: i32, %arg1: i32) -> (i32, i32) {
    %c0_i32 = arith.constant 0 : i32
    %c0_i32_0 = arith.constant 0 : i32
    %c0_i32_1 = arith.constant 0 : i32
    return %c0_i32, %c0_i32_0 : i32, i32
  }
  func.func @transform_6(%arg0: i32, %arg1: i32) -> (i32, i32) {
    %c0_i32 = arith.constant 0 : i32
    %c0_i32_0 = arith.constant 0 : i32
    %c0_i32_1 = arith.constant 0 : i32
    return %c0_i32, %c0_i32_0 : i32, i32
  }
  func.func @transform_7(%arg0: i32, %arg1: i32) -> (i32, i32) {
    %c0_i32 = arith.constant 0 : i32
    %c0_i32_0 = arith.constant 0 : i32
    %c0_i32_1 = arith.constant 0 : i32
    return %c0_i32, %c0_i32_0 : i32, i32
  }
  func.func @transform_8(%arg0: i32, %arg1: i32) -> i32 {
    %c0_i32 = arith.constant 0 : i32
    %c0_i32_0 = arith.constant 0 : i32
    return %c0_i32 : i32
  }
  func.func @transform_9(%arg0: i32, %arg1: i32) -> (i32, i32, i32) {
    %c0_i32 = arith.constant 0 : i32
    %c0_i32_0 = arith.constant 0 : i32
    return %arg0, %c0_i32, %arg1 : i32, i32, i32
  }
}

</mosaic_0001>

<llo_original>
// kernel: tpu_custom_call.1
$region0: #{tpu_custom_call.1}
  #allocation0 [shape = 'u32[]', space=smem, size = 0x4, offset = 0x4, fixed_abs, tag = 'smem constant byte address 0x4 - core index']
  #allocation1 [shape = 'u32[144,128]{1,0:T(1,128)}', space=vmem, size = 0x12000, scoped, tag = 'internal scratch']
  #allocation2 [shape = 'f32[1]{0:T(128)S(6)}', space=smem, size = 0x200, scoped, tag = 'scoped memory for tpu_custom_call.1']
  %s0 = inlined_call_operand.vmem [shape: f32[2,8,256], index: 0, kind: input, shape index: {}]
  %s1 = inlined_call_operand.hbm [shape: f32[2,8,256], index: 1, kind: input, shape index: {}]
  %s2 = inlined_call_operand.vmem [shape: bf16[16,16], index: 2, kind: input, shape index: {}]
  %s3 = inlined_call_operand.vmem [shape: f32[16,1], index: 3, kind: input, shape index: {}]
  %s4 = inlined_call_operand.vmem [shape: f32[16,1], index: 4, kind: input, shape index: {}]
  %s5 = inlined_call_operand.vmem [shape: bf16[8,8], index: 5, kind: input, shape index: {}]
  %s6 = inlined_call_operand.vmem [shape: f32[8,1], index: 6, kind: input, shape index: {}]
  %s7 = inlined_call_operand.vmem [shape: bf16[8,8], index: 7, kind: input, shape index: {}]
  %s8 = inlined_call_operand.<no memory space> [shape: f32[1], index: 8, kind: input, shape index: {}]
  %s9 = inlined_call_operand.hbm [shape: f32[2,8,256], index: 9, kind: output, shape index: {}]
  %s10 = sld [smem:[#allocation0]]
  $region73: #{tpu_custom_call.1} parent=0
    _
  %s12 = ssub.s32 1, %s10
  %s13 = scalar_select 0, %s12, %s10
  %14 = sst [smem:[#allocation2]] %s8
  $region1: #{tpu_custom_call.1} parent=0
    #allocation3 [shape = 'u8[16384]{0}', space=vmem, size = 0x4000, scoped, tag = 'input window, operand 1']
    #allocation4 [shape = 's32[2]{0}', space=sflag, size = 0x8, scoped, tag = 'scoped memory for tpu_custom_call.1']
    #allocation5 [shape = 's32[2]{0}', space=sflag, size = 0x8, scoped, tag = 'scoped memory for tpu_custom_call.1']
    #allocation6 [shape = 'u8[16384]{0}', space=vmem, size = 0x4000, scoped, tag = 'output window, operand 0']
    %15 = vsyncpa [#allocation4], 0
    %s16 = scalar_lea.sflag [#allocation4], 1
    %17 = vsyncpa %s16, 0
    %18 = vsyncpa [#allocation5], 0
    %s19 = scalar_lea.sflag [#allocation5], 1
    %20 = vsyncpa %s19, 0
    loop: start=0, step=1, limit=4
    $region2: #{tpu_custom_call.1} parent=1 // loop_pre_header
      _
    $region3: #{tpu_custom_call.1} parent=1 // loop_header
      %s22 = sphi 0, %s26
      %p23 = scmp.ge.s32.totalorder %s22, 4
      %s29 = sphi 0, %s41
      %s30 = sphi 0, %s37
      %s31 = sphi 0, %s29
      %s32 = sphi 0, %s30
      %s33 = sphi 0, %s31
      %s34 = sphi 0, %s32
      %s46 = sphi 0, %s48
      %s49 = sphi 0, %s46
      %s50 = sphi 0, %s49
      %s66 = sphi 0, %s50
      %s74 = sphi 0, %s76
      %s77 = sphi 0, %s74
      %s78 = sphi 0, %s77
      %s94 = sphi 0, %s78
      %s98 = sphi 0, %s98
      %s100 = sphi 0, %s98
      %s101 = sphi 0, %s100
      %s115 = sphi 0, %s101
      %s119 = sphi 0, %s119
      %s121 = sphi 0, %s119
      %s122 = sphi 0, %s121
      %s136 = sphi 0, %s122
      %s140 = sphi 0, %s140
      %s142 = sphi 0, %s140
      %s143 = sphi 0, %s142
      %s157 = sphi 0, %s143
      %s161 = sphi 0, %s161
      %s163 = sphi 0, %s161
      %s164 = sphi 0, %s163
      %s178 = sphi 0, %s164
      %s182 = sphi 0, %s182
      %s184 = sphi 0, %s182
      %s185 = sphi 0, %s184
      %s199 = sphi 0, %s185
      %s203 = sphi 0, %s203
      %s205 = sphi 0, %s203
      %s206 = sphi 0, %s205
      %s220 = sphi 0, %s206
      %s224 = sphi 0, %s224
      %s226 = sphi 0, %s224
      %s227 = sphi 0, %s226
      %s241 = sphi 0, %s227
      %s249 = sphi 0, %s251
      %s252 = sphi 0, %s249
      %s253 = sphi 0, %s252
      %s269 = sphi 0, %s253
    $region4: #{tpu_custom_call.1} parent=1 // loop_header_branch
      %25 = sbr.rel (%p23) target = $region8
    $region5: #{tpu_custom_call.1} parent=1 // loop_body
      %s27 = ssub.s32 %s22, 1
      %s28 = ssub.s32 %s22, 2
      %s35 = sadd.s32 1, %s30
      %p36 = scmp.ge.s32.totalorder %s35, 1
      %s37 = scalar_select %p36, 0, %s35
      %s38 = sadd.s32 1, %s29
      %s39 = scalar_select %p36, %s38, %s29
      %p40 = scmp.ge.s32.totalorder %s39, 2
      %s41 = scalar_select %p40, 0, %s39
      %s42 = ssub.s32 %s29, %s41
      %s43 = ssub.s32 %s30, %s37
      %s44 = sor.u32 %s42, %s43
      %p45 = scmp.eq.s32.totalorder %s44, 0
      %s47 = sadd.s32 %s46, 1
      %s48 = scalar_select %p45, %s46, %s47
      %p51 = pneg %p45
      %p52 = scmp.eq.s32.totalorder %s22, 1
      %p53 = por %p51, %p52
      %p54 = scmp.ne.s32.totalorder %s46, %s49
      %p55 = scmp.eq.s32.totalorder %s22, 0
      %p56 = por %p54, %p55
      %p57 = scmp.ne.s32.totalorder %s46, %s49
      %p58 = scmp.eq.s32.totalorder %s27, 1
      %p59 = por %p57, %p58
      %p60 = scmp.ne.s32.totalorder %s49, %s50
      %p61 = scmp.eq.s32.totalorder %s27, 0
      %p62 = por %p60, %p61
      %p63 = scmp.ne.s32.totalorder %s49, %s50
      %p64 = scmp.eq.s32.totalorder %s28, 1
      %p65 = por %p63, %p64
      %p67 = scmp.ne.s32.totalorder %s50, %s66
      %p68 = scmp.eq.s32.totalorder %s28, 0
      %p69 = por %p67, %p68
      %s70 = ssub.s32 %s29, %s41
      %s71 = ssub.s32 %s30, %s37
      %s72 = sor.u32 %s70, %s71
      %p73 = scmp.eq.s32.totalorder %s72, 0
      %s75 = sadd.s32 %s74, 1
      %s76 = scalar_select %p73, %s74, %s75
      %p79 = pneg %p73
      %p80 = scmp.eq.s32.totalorder %s22, 1
      %p81 = por %p79, %p80
      %p82 = scmp.ne.s32.totalorder %s74, %s77
      %p83 = scmp.eq.s32.totalorder %s22, 0
      %p84 = por %p82, %p83
      %p85 = scmp.ne.s32.totalorder %s74, %s77
      %p86 = scmp.eq.s32.totalorder %s27, 1
      %p87 = por %p85, %p86
      %p88 = scmp.ne.s32.totalorder %s77, %s78
      %p89 = scmp.eq.s32.totalorder %s27, 0
      %p90 = por %p88, %p89
      %p91 = scmp.ne.s32.totalorder %s77, %s78
      %p92 = scmp.eq.s32.totalorder %s28, 1
      %p93 = por %p91, %p92
      %p95 = scmp.ne.s32.totalorder %s78, %s94
      %p96 = scmp.eq.s32.totalorder %s28, 0
      %p97 = por %p95, %p96
      %s99 = sadd.s32 %s98, 1
      %p102 = scmp.eq.s32.totalorder %s22, 1
      %p103 = scmp.ne.s32.totalorder %s98, %s100
      %p104 = scmp.eq.s32.totalorder %s22, 0
      %p105 = por %p103, %p104
      %p106 = scmp.ne.s32.totalorder %s98, %s100
      %p107 = scmp.eq.s32.totalorder %s27, 1
      %p108 = por %p106, %p107
      %p109 = scmp.ne.s32.totalorder %s100, %s101
      %p110 = scmp.eq.s32.totalorder %s27, 0
      %p111 = por %p109, %p110
      %p112 = scmp.ne.s32.totalorder %s100, %s101
      %p113 = scmp.eq.s32.totalorder %s28, 1
      %p114 = por %p112, %p113
      %p116 = scmp.ne.s32.totalorder %s101, %s115
      %p117 = scmp.eq.s32.totalorder %s28, 0
      %p118 = por %p116, %p117
      %s120 = sadd.s32 %s119, 1
      %p123 = scmp.eq.s32.totalorder %s22, 1
      %p124 = scmp.ne.s32.totalorder %s119, %s121
      %p125 = scmp.eq.s32.totalorder %s22, 0
      %p126 = por %p124, %p125
      %p127 = scmp.ne.s32.totalorder %s119, %s121
      %p128 = scmp.eq.s32.totalorder %s27, 1
      %p129 = por %p127, %p128
      %p130 = scmp.ne.s32.totalorder %s121, %s122
      %p131 = scmp.eq.s32.totalorder %s27, 0
      %p132 = por %p130, %p131
      %p133 = scmp.ne.s32.totalorder %s121, %s122
      %p134 = scmp.eq.s32.totalorder %s28, 1
      %p135 = por %p133, %p134
      %p137 = scmp.ne.s32.totalorder %s122, %s136
      %p138 = scmp.eq.s32.totalorder %s28, 0
      %p139 = por %p137, %p138
      %s141 = sadd.s32 %s140, 1
      %p144 = scmp.eq.s32.totalorder %s22, 1
      %p145 = scmp.ne.s32.totalorder %s140, %s142
      %p146 = scmp.eq.s32.totalorder %s22, 0
      %p147 = por %p145, %p146
      %p148 = scmp.ne.s32.totalorder %s140, %s142
      %p149 = scmp.eq.s32.totalorder %s27, 1
      %p150 = por %p148, %p149
      %p151 = scmp.ne.s32.totalorder %s142, %s143
      %p152 = scmp.eq.s32.totalorder %s27, 0
      %p153 = por %p151, %p152
      %p154 = scmp.ne.s32.totalorder %s142, %s143
      %p155 = scmp.eq.s32.totalorder %s28, 1
      %p156 = por %p154, %p155
      %p158 = scmp.ne.s32.totalorder %s143, %s157
      %p159 = scmp.eq.s32.totalorder %s28, 0
      %p160 = por %p158, %p159
      %s162 = sadd.s32 %s161, 1
      %p165 = scmp.eq.s32.totalorder %s22, 1
      %p166 = scmp.ne.s32.totalorder %s161, %s163
      %p167 = scmp.eq.s32.totalorder %s22, 0
      %p168 = por %p166, %p167
      %p169 = scmp.ne.s32.totalorder %s161, %s163
      %p170 = scmp.eq.s32.totalorder %s27, 1
      %p171 = por %p169, %p170
      %p172 = scmp.ne.s32.totalorder %s163, %s164
      %p173 = scmp.eq.s32.totalorder %s27, 0
      %p174 = por %p172, %p173
      %p175 = scmp.ne.s32.totalorder %s163, %s164
      %p176 = scmp.eq.s32.totalorder %s28, 1
      %p177 = por %p175, %p176
      %p179 = scmp.ne.s32.totalorder %s164, %s178
      %p180 = scmp.eq.s32.totalorder %s28, 0
      %p181 = por %p179, %p180
      %s183 = sadd.s32 %s182, 1
      %p186 = scmp.eq.s32.totalorder %s22, 1
      %p187 = scmp.ne.s32.totalorder %s182, %s184
      %p188 = scmp.eq.s32.totalorder %s22, 0
      %p189 = por %p187, %p188
      %p190 = scmp.ne.s32.totalorder %s182, %s184
      %p191 = scmp.eq.s32.totalorder %s27, 1
      %p192 = por %p190, %p191
      %p193 = scmp.ne.s32.totalorder %s184, %s185
      %p194 = scmp.eq.s32.totalorder %s27, 0
      %p195 = por %p193, %p194
      %p196 = scmp.ne.s32.totalorder %s184, %s185
      %p197 = scmp.eq.s32.totalorder %s28, 1
      %p198 = por %p196, %p197
      %p200 = scmp.ne.s32.totalorder %s185, %s199
      %p201 = scmp.eq.s32.totalorder %s28, 0
      %p202 = por %p200, %p201
      %s204 = sadd.s32 %s203, 1
      %p207 = scmp.eq.s32.totalorder %s22, 1
      %p208 = scmp.ne.s32.totalorder %s203, %s205
      %p209 = scmp.eq.s32.totalorder %s22, 0
      %p210 = por %p208, %p209
      %p211 = scmp.ne.s32.totalorder %s203, %s205
      %p212 = scmp.eq.s32.totalorder %s27, 1
      %p213 = por %p211, %p212
      %p214 = scmp.ne.s32.totalorder %s205, %s206
      %p215 = scmp.eq.s32.totalorder %s27, 0
      %p216 = por %p214, %p215
      %p217 = scmp.ne.s32.totalorder %s205, %s206
      %p218 = scmp.eq.s32.totalorder %s28, 1
      %p219 = por %p217, %p218
      %p221 = scmp.ne.s32.totalorder %s206, %s220
      %p222 = scmp.eq.s32.totalorder %s28, 0
      %p223 = por %p221, %p222
      %s225 = sadd.s32 %s224, 1
      %p228 = scmp.eq.s32.totalorder %s22, 1
      %p229 = scmp.ne.s32.totalorder %s224, %s226
      %p230 = scmp.eq.s32.totalorder %s22, 0
      %p231 = por %p229, %p230
      %p232 = scmp.ne.s32.totalorder %s224, %s226
      %p233 = scmp.eq.s32.totalorder %s27, 1
      %p234 = por %p232, %p233
      %p235 = scmp.ne.s32.totalorder %s226, %s227
      %p236 = scmp.eq.s32.totalorder %s27, 0
      %p237 = por %p235, %p236
      %p238 = scmp.ne.s32.totalorder %s226, %s227
      %p239 = scmp.eq.s32.totalorder %s28, 1
      %p240 = por %p238, %p239
      %p242 = scmp.ne.s32.totalorder %s227, %s241
      %p243 = scmp.eq.s32.totalorder %s28, 0
      %p244 = por %p242, %p243
      %s245 = ssub.s32 %s29, %s41
      %s246 = ssub.s32 %s30, %s37
      %s247 = sor.u32 %s245, %s246
      %p248 = scmp.eq.s32.totalorder %s247, 0
      %s250 = sadd.s32 %s249, 1
      %s251 = scalar_select %p248, %s249, %s250
      %p254 = pneg %p248
      %p255 = scmp.eq.s32.totalorder %s22, 1
      %p256 = por %p254, %p255
      %p257 = scmp.ne.s32.totalorder %s249, %s252
      %p258 = scmp.eq.s32.totalorder %s22, 0
      %p259 = por %p257, %p258
      %p260 = scmp.ne.s32.totalorder %s249, %s252
      %p261 = scmp.eq.s32.totalorder %s27, 1
      %p262 = por %p260, %p261
      %p263 = scmp.ne.s32.totalorder %s252, %s253
      %p264 = scmp.eq.s32.totalorder %s27, 0
      %p265 = por %p263, %p264
      %p266 = scmp.ne.s32.totalorder %s252, %s253
      %p267 = scmp.eq.s32.totalorder %s28, 1
      %p268 = por %p266, %p267
      %p270 = scmp.ne.s32.totalorder %s253, %s269
      %p271 = scmp.eq.s32.totalorder %s28, 0
      %p272 = por %p270, %p271
      %p273 = scmp.le.s32.totalorder 1, %s22
      %p274 = scmp.lt.s32.totalorder %s22, 3
      %p275 = pnand %p273, %p274
      %p276 = pneg %p275
      // Predicated region
      $region9: #{tpu_custom_call.1} parent=5 // pred_check
        _
      $region10: #{tpu_custom_call.1} parent=5 // pred_check_branch
        %278 = sbr.rel (%p275) target = $region12
      $region11: #{tpu_custom_call.1} parent=5 // pred_region
        %s279 = ssub.s32 %s22, 1
        // Predicated region
        $region13: #{tpu_custom_call.1} parent=11 // pred_check
          %p280 = pneg %p111
        $region14: #{tpu_custom_call.1} parent=11 // pred_check_branch
          %282 = sbr.rel (%p280) target = $region16
        $region15: #{tpu_custom_call.1} parent=11 // pred_region
          _
        $region16: #{tpu_custom_call.1} parent=11 // pred_fallthru
          _
        // Predicated region
        $region17: #{tpu_custom_call.1} parent=11 // pred_check
          %p283 = pneg %p132
        $region18: #{tpu_custom_call.1} parent=11 // pred_check_branch
          %285 = sbr.rel (%p283) target = $region20
        $region19: #{tpu_custom_call.1} parent=11 // pred_region
          _
        $region20: #{tpu_custom_call.1} parent=11 // pred_fallthru
          _
        // Predicated region
        $region21: #{tpu_custom_call.1} parent=11 // pred_check
          %p286 = pneg %p153
        $region22: #{tpu_custom_call.1} parent=11 // pred_check_branch
          %288 = sbr.rel (%p286) target = $region24
        $region23: #{tpu_custom_call.1} parent=11 // pred_region
          _
        $region24: #{tpu_custom_call.1} parent=11 // pred_fallthru
          _
        // Predicated region
        $region25: #{tpu_custom_call.1} parent=11 // pred_check
          %p289 = pneg %p174
        $region26: #{tpu_custom_call.1} parent=11 // pred_check_branch
          %291 = sbr.rel (%p289) target = $region28
        $region27: #{tpu_custom_call.1} parent=11 // pred_region
          _
        $region28: #{tpu_custom_call.1} parent=11 // pred_fallthru
          _
        // Predicated region
        $region29: #{tpu_custom_call.1} parent=11 // pred_check
          %p292 = pneg %p195
        $region30: #{tpu_custom_call.1} parent=11 // pred_check_branch
          %294 = sbr.rel (%p292) target = $region32
        $region31: #{tpu_custom_call.1} parent=11 // pred_region
          _
        $region32: #{tpu_custom_call.1} parent=11 // pred_fallthru
          _
        // Predicated region
        $region33: #{tpu_custom_call.1} parent=11 // pred_check
          %p295 = pneg %p216
        $region34: #{tpu_custom_call.1} parent=11 // pred_check_branch
          %297 = sbr.rel (%p295) target = $region36
        $region35: #{tpu_custom_call.1} parent=11 // pred_region
          _
        $region36: #{tpu_custom_call.1} parent=11 // pred_fallthru
          _
        // Predicated region
        $region37: #{tpu_custom_call.1} parent=11 // pred_check
          %p298 = pneg %p237
        $region38: #{tpu_custom_call.1} parent=11 // pred_check_branch
          %300 = sbr.rel (%p298) target = $region40
        $region39: #{tpu_custom_call.1} parent=11 // pred_region
          _
        $region40: #{tpu_custom_call.1} parent=11 // pred_fallthru
          _
      $region12: #{tpu_custom_call.1} parent=5 // pred_fallthru
        _
      %p301 = scmp.lt.s32.totalorder %s22, 2
      // Predicated region
      $region41: #{tpu_custom_call.1} parent=5 // pred_check
        %p302 = pneg %p301
      $region42: #{tpu_custom_call.1} parent=5 // pred_check_branch
        %304 = sbr.rel (%p302) target = $region44
      $region43: #{tpu_custom_call.1} parent=5 // pred_region
        // Predicated region
        $region45: #{tpu_custom_call.1} parent=43 // pred_check
          %p305 = pneg %p56
        $region46: #{tpu_custom_call.1} parent=43 // pred_check_branch
          %307 = sbr.rel (%p305) target = $region48
        $region47: #{tpu_custom_call.1} parent=43 // pred_region
          %s308 = smul.u32 2, %s30
          %p309 = scmp.lt.s32.totalorder %s29, 1
          %s310 = scalar_select %p309, %s29, 1
          %p311 = scmp.lt.s32.totalorder %s308, 1
          %s312 = scalar_select %p311, %s308, 1
          %s313 = smul.addr %s310, 2
          %s314 = sadd.s32 %s312, %s313
          %s315 = smul.addr %s314, 8
          %s316 = scalar_lea.vmem %s0, %s315
          %s317 = smul.u32 2, %s30
        $region48: #{tpu_custom_call.1} parent=43 // pred_fallthru
          _
        // Predicated region
        $region49: #{tpu_custom_call.1} parent=43 // pred_check
          %p318 = pneg %p84
        $region50: #{tpu_custom_call.1} parent=43 // pred_check_branch
          %320 = sbr.rel (%p318) target = $region52
        $region51: #{tpu_custom_call.1} parent=43 // pred_region
          %s321 = sand.u32 %s74, 1
          %s322 = scalar_lea.sflag [#allocation4], %s321
          %s323 = sand.u32 %s74, 1
          %s324 = smul.addr %s323, 16
          %s325 = scalar_lea.vmem [#allocation3], %s324
          %s326 = smul.u32 2, %s30
          %s328 = ssub.s32 256, 256
          %329 = vsyncadd %s322, %s328
          %s330 = smul.addr %s29, 2
          %s331 = sadd.s32 %s326, %s330
          %s332 = smul.addr %s331, 128
          %s333 = scalar_lea.hbm %s1, %s332
          %s335 = sshll.u32 %s325, 4
          %s336 = int_to_ptr.vmem [resolvable:$true] %s335
          %338 = dma.hbm_to_vmem [thread:$0]  %s333, 256, %s336, %s322
        $region52: #{tpu_custom_call.1} parent=43 // pred_fallthru
          _
      $region44: #{tpu_custom_call.1} parent=5 // pred_fallthru
        _
      %p339 = scmp.le.s32.totalorder 1, %s22
      %p340 = scmp.lt.s32.totalorder %s22, 3
      %p341 = pnand %p339, %p340
      %p342 = pneg %p341
      // Predicated region
      $region53: #{tpu_custom_call.1} parent=5 // pred_check
        _
      $region54: #{tpu_custom_call.1} parent=5 // pred_check_branch
        %344 = sbr.rel (%p341) target = $region56
      $region55: #{tpu_custom_call.1} parent=5 // pred_region
        %s345 = ssub.s32 %s22, 1
        %s346 = sand.u32 %s77, 1
        %s347 = scalar_lea.sflag [#allocation4], %s346
        %s348 = sand.u32 %s77, 1
        %s349 = smul.addr %s348, 16
        %s350 = scalar_lea.vmem [#allocation3], %s349
        // Predicated region
        $region57: #{tpu_custom_call.1} parent=55 // pred_check
          %p351 = pneg %p90
        $region58: #{tpu_custom_call.1} parent=55 // pred_check_branch
          %353 = sbr.rel (%p351) target = $region60
        $region59: #{tpu_custom_call.1} parent=55 // pred_region
          %354 = dma.done %s347, 256
        $region60: #{tpu_custom_call.1} parent=55 // pred_fallthru
          _
        %s355 = smul.u32 2, %s32
        %p356 = scmp.lt.s32.totalorder %s31, 1
        %s357 = scalar_select %p356, %s31, 1
        %p358 = scmp.lt.s32.totalorder %s355, 1
        %s359 = scalar_select %p358, %s355, 1
        %s360 = smul.addr %s357, 2
        %s361 = sadd.s32 %s359, %s360
        %s362 = smul.addr %s361, 8
        %s363 = scalar_lea.vmem %s0, %s362
        %p364 = pneg %p62
        %p365 = pneg %p59
        %s366 = sand.u32 %s77, 1
        %s367 = scalar_lea.sflag [#allocation4], %s366
        %s368 = sand.u32 %s77, 1
        %s369 = smul.addr %s368, 16
        %s370 = scalar_lea.vmem [#allocation3], %s369
        %p371 = pneg %p90
        %p372 = pneg %p87
        %p373 = pneg %p111
        %p374 = pneg %p108
        %p375 = pneg %p132
        %p376 = pneg %p129
        %p377 = pneg %p153
        %p378 = pneg %p150
        %p379 = pneg %p174
        %p380 = pneg %p171
        %p381 = pneg %p195
        %p382 = pneg %p192
        %p383 = pneg %p216
        %p384 = pneg %p213
        %p385 = pneg %p237
        %p386 = pneg %p234
        %p387 = pneg %p265
        %p388 = pneg %p262
        %s389 = sand.u32 %s252, 1
        %s390 = scalar_lea.sflag [#allocation5], %s389
        %s391 = sand.u32 %s252, 1
        %s392 = smul.addr %s391, 16
        %s393 = scalar_lea.vmem [#allocation6], %s392
        %s394 = smul.u32 2, %s32
        %p395 = scmp.lt.s32.totalorder %s31, 1
        %s396 = scalar_select %p395, %s31, 1
        %p397 = scmp.lt.s32.totalorder %s394, 1
        %s398 = scalar_select %p397, %s394, 1
        %s399 = smul.addr %s396, 2
        %s400 = sadd.s32 %s398, %s399
        %s401 = smul.addr %s400, 8
        %s402 = scalar_lea.vmem %s0, %s401
        %s403 = smul.u32 2, %s32
        %s404 = smul.u32 2, %s32
        %s405 = smul.u32 2, %s32
        %v407 = vld [vmem:[%s350] sm:$0xff]
        %v408 = vld [vmem:[%s350 + $0x8] sm:$0xff]
        %v409 = vld [vmem:[%s402] sm:$0xff]
        %v410 = vld [vmem:[%s402 + $0x8] sm:$0xff]
        %v411 = vpack.c.bf16 %v407, %v409
        %v412 = vpack.c.bf16 %v408, %v410
        %v413 = vld [vmem:[%s2] sm:$0xf]
        %v414 = vld [vmem:[%s2 + $0x4] sm:$0xf]
        %v415 = vld [vmem:[%s3] sm:$0xff]
        %v416 = vld [vmem:[%s3 + $0x8] sm:$0xff]
        %418 = vset.pattern.permute.xlu0 0
        %419 = vperm.xlu0 %418, %v415
        %v420 = vpop.permute.xlu0 %419
        %423 = vset.pattern.permute.xlu0 0
        %424 = vperm.xlu0 %423, %v416
        %v425 = vpop.permute.xlu0 %424
        %v429 = vunpack.c.l.b16 %v413
        %v430 = vunpack.c.l.b16 %v414
        %v431 = vpack.c.b16 %v430, %v429
        %vm432 = vcmask 130048
        %v434 = vsel %vm432, %v431, 0
        %436 = vmatprep.subr.bf16.mxu0 %v412
        %437 = vmatpush1.bf16.msra.mxu0 %v411
        %438 = vmatprep.subr.bf16.mxu0 0
        %439 = vmatpush1.bf16.msra.mxu0 0
        %440 = vmatprep.subr.bf16.mxu0 0
        %441 = vmatpush1.bf16.msra.mxu0 0
        %442 = vmatprep.subr.bf16.mxu0 0
        %443 = vmatpush1.bf16.msra.mxu0 0
        %444 = vmatprep.subr.bf16.mxu0 0
        %445 = vmatpush1.bf16.msra.mxu0 0
        %446 = vmatprep.subr.bf16.mxu0 0
        %447 = vmatpush1.bf16.msra.mxu0 0
        %448 = vmatprep.subr.bf16.mxu0 0
        %449 = vmatpush1.bf16.msra.mxu0 0
        %450 = vmatprep.subr.bf16.mxu0 0
        %451 = vmatpush1.bf16.msra.mxu0 0
        %452 = vmatprep.subr.bf16.mxu0 0
        %453 = vmatpush1.bf16.msra.mxu0 0
        %454 = vmatprep.subr.bf16.mxu0 0
        %455 = vmatpush1.bf16.msra.mxu0 0
        %456 = vmatprep.subr.bf16.mxu0 0
        %457 = vmatpush1.bf16.msra.mxu0 0
        %458 = vmatprep.subr.bf16.mxu0 0
        %459 = vmatpush1.bf16.msra.mxu0 0
        %460 = vmatprep.subr.bf16.mxu0 0
        %461 = vmatpush1.bf16.msra.mxu0 0
        %462 = vmatprep.subr.bf16.mxu0 0
        %463 = vmatpush1.bf16.msra.mxu0 0
        %464 = vmatprep.subr.bf16.mxu0 0
        %465 = vmatpush1.bf16.msra.mxu0 0
        %466 = vmatprep.subr.bf16.mxu0 0
        %467 = vmatpush1.bf16.msra.mxu0 0
        %468 = vmatprep.mubr.bf16.mxu0 0
        %469 = vmatmul.mubr.bf16.gmra.mrb[0].mxu0 %v434
        %v470 = vpop.f32.mrb[0].mxu0
        %v471 = vadd.f32 %v420, %v470
        %v472 = vpop.f32.mrb[0].mxu0
        %v473 = vadd.f32 %v420, %v472
        %v474 = vpop.f32.mrb[0].mxu0
        %v475 = vadd.f32 %v425, %v474
        %v476 = vpop.f32.mrb[0].mxu0
        %v477 = vadd.f32 %v425, %v476
        %478 = vdwg.mxu0
        %v479 = vmax.f32 %v471, 0.0
        %v480 = vmax.f32 %v473, 0.0
        %v481 = vmax.f32 %v475, 0.0
        %v482 = vmax.f32 %v477, 0.0
        %v483 = vld [vmem:[%s4] sm:$0xff]
        %v484 = vld [vmem:[%s4 + $0x8] sm:$0xff]
        %486 = vset.pattern.permute.xlu0 0
        %487 = vperm.xlu0 %486, %v483
        %v488 = vpop.permute.xlu0 %487
        %491 = vset.pattern.permute.xlu0 0
        %492 = vperm.xlu0 %491, %v484
        %v493 = vpop.permute.xlu0 %492
        %v495 = vmul.f32 %v479, %v488
        %v496 = vmul.f32 %v480, %v488
        %v497 = vmul.f32 %v481, %v493
        %v498 = vmul.f32 %v482, %v493
        %v499 = vadd.f32 %v495, %v497
        %v500 = vrot.slane %v499, 4
        %v501 = vadd.f32 %v499, %v500
        %v502 = vrot.slane %v501, 2
        %v503 = vadd.f32 %v501, %v502
        %v504 = vrot.slane %v503, 1
        %v505 = vadd.f32 %v503, %v504
        %v506 = vadd.f32 %v496, %v498
        %v507 = vrot.slane %v506, 4
        %v508 = vadd.f32 %v506, %v507
        %v509 = vrot.slane %v508, 2
        %v510 = vadd.f32 %v508, %v509
        %v511 = vrot.slane %v510, 1
        %v512 = vadd.f32 %v510, %v511
        %s513 = sld [smem:[#allocation2]]
        %v514 = vstv %s513
        %v515 = vadd.f32 %v505, %v514
        %v516 = vadd.f32 %v512, %v514
        %v517 = vxor.u32 %v515, 2147483648
        %v518 = vxor.u32 %v516, 2147483648
        %v519 = vmul.f32 %v517, 1.442695
        %v520 = vpow.pop %v519
        %v521 = vmul.f32 %v518, 1.442695
        %v522 = vpow.pop %v521
        %v523 = vadd.f32 %v520, 1.0
        %v524 = vadd.f32 %v522, 1.0
        %v525 = vrcp.pop %v523
        %v526 = vmul.f32 1.0, %v525
        %v527 = vrcp.pop %v524
        %v528 = vmul.f32 1.0, %v527
        %v529 = vld [vmem:[%s5] sm:$0xf]
        %v530 = vld [vmem:[%s6] sm:$0xff]
        %532 = vset.pattern.permute.xlu0 0
        %533 = vperm.xlu0 %532, %v530
        %v534 = vpop.permute.xlu0 %533
        %v538 = vrot.slane %v411, 4
        %v539 = vrot.slane %v412, 4
        %vm540 = vcmask 64512
        %v542 = vsel %vm540, %v529, 0
        %vm544 = vcmask 1043456
        %v546 = vsel %vm544, %v538, 0
        %v549 = vsel %vm544, %v539, 0
        %551 = vmatprep.subr.bf16.mxu0 %v549
        %552 = vmatpush1.bf16.msra.mxu0 %v546
        %553 = vmatprep.subr.bf16.mxu0 0
        %554 = vmatpush1.bf16.msra.mxu0 0
        %555 = vmatprep.subr.bf16.mxu0 0
        %556 = vmatpush1.bf16.msra.mxu0 0
        %557 = vmatprep.subr.bf16.mxu0 0
        %558 = vmatpush1.bf16.msra.mxu0 0
        %559 = vmatprep.subr.bf16.mxu0 0
        %560 = vmatpush1.bf16.msra.mxu0 0
        %561 = vmatprep.subr.bf16.mxu0 0
        %562 = vmatpush1.bf16.msra.mxu0 0
        %563 = vmatprep.subr.bf16.mxu0 0
        %564 = vmatpush1.bf16.msra.mxu0 0
        %565 = vmatprep.subr.bf16.mxu0 0
        %566 = vmatpush1.bf16.msra.mxu0 0
        %567 = vmatprep.subr.bf16.mxu0 0
        %568 = vmatpush1.bf16.msra.mxu0 0
        %569 = vmatprep.subr.bf16.mxu0 0
        %570 = vmatpush1.bf16.msra.mxu0 0
        %571 = vmatprep.subr.bf16.mxu0 0
        %572 = vmatpush1.bf16.msra.mxu0 0
        %573 = vmatprep.subr.bf16.mxu0 0
        %574 = vmatpush1.bf16.msra.mxu0 0
        %575 = vmatprep.subr.bf16.mxu0 0
        %576 = vmatpush1.bf16.msra.mxu0 0
        %577 = vmatprep.subr.bf16.mxu0 0
        %578 = vmatpush1.bf16.msra.mxu0 0
        %579 = vmatprep.subr.bf16.mxu0 0
        %580 = vmatpush1.bf16.msra.mxu0 0
        %581 = vmatprep.subr.bf16.mxu0 0
        %582 = vmatpush1.bf16.msra.mxu0 0
        %583 = vmatprep.mubr.bf16.mxu0 0
        %584 = vmatmul.mubr.bf16.gmra.mrb[0].mxu0 %v542
        %v585 = vpop.f32.mrb[0].mxu0
        %v586 = vadd.f32 %v534, %v585
        %v587 = vpop.f32.mrb[0].mxu0
        %v588 = vadd.f32 %v534, %v587
        %v589 = vpop.f32.mrb[0].mxu0
        %v590 = vpop.f32.mrb[0].mxu0
        %591 = vdwg.mxu0
        %v592 = vmax.f32 %v586, 0.0
        %v593 = vmax.f32 %v588, 0.0
        %v594 = vld [vmem:[%s7] sm:$0xf]
        %v595 = vpack.c.bf16 %v592, %v592
        %v596 = vpack.c.bf16 %v593, %v593
        %v598 = vsel %vm540, %v594, 0
        %v601 = vsel %vm544, %v595, 0
        %v604 = vsel %vm544, %v596, 0
        %606 = vmatprep.subr.bf16.mxu0 %v604
        %607 = vmatpush1.bf16.msra.mxu0 %v601
        %608 = vmatprep.subr.bf16.mxu0 0
        %609 = vmatpush1.bf16.msra.mxu0 0
        %610 = vmatprep.subr.bf16.mxu0 0
        %611 = vmatpush1.bf16.msra.mxu0 0
        %612 = vmatprep.subr.bf16.mxu0 0
        %613 = vmatpush1.bf16.msra.mxu0 0
        %614 = vmatprep.subr.bf16.mxu0 0
        %615 = vmatpush1.bf16.msra.mxu0 0
        %616 = vmatprep.subr.bf16.mxu0 0
        %617 = vmatpush1.bf16.msra.mxu0 0
        %618 = vmatprep.subr.bf16.mxu0 0
        %619 = vmatpush1.bf16.msra.mxu0 0
        %620 = vmatprep.subr.bf16.mxu0 0
        %621 = vmatpush1.bf16.msra.mxu0 0
        %622 = vmatprep.subr.bf16.mxu0 0
        %623 = vmatpush1.bf16.msra.mxu0 0
        %624 = vmatprep.subr.bf16.mxu0 0
        %625 = vmatpush1.bf16.msra.mxu0 0
        %626 = vmatprep.subr.bf16.mxu0 0
        %627 = vmatpush1.bf16.msra.mxu0 0
        %628 = vmatprep.subr.bf16.mxu0 0
        %629 = vmatpush1.bf16.msra.mxu0 0
        %630 = vmatprep.subr.bf16.mxu0 0
        %631 = vmatpush1.bf16.msra.mxu0 0
        %632 = vmatprep.subr.bf16.mxu0 0
        %633 = vmatpush1.bf16.msra.mxu0 0
        %634 = vmatprep.subr.bf16.mxu0 0
        %635 = vmatpush1.bf16.msra.mxu0 0
        %636 = vmatprep.subr.bf16.mxu0 0
        %637 = vmatpush1.bf16.msra.mxu0 0
        %638 = vmatprep.mubr.bf16.mxu0 0
        %639 = vmatmul.mubr.bf16.gmra.mrb[0].mxu0 %v598
        %v640 = vpop.f32.mrb[0].mxu0
        %v641 = vadd.f32 0.0, %v640
        %v642 = vpop.f32.mrb[0].mxu0
        %v643 = vadd.f32 0.0, %v642
        %v644 = vpop.f32.mrb[0].mxu0
        %v645 = vpop.f32.mrb[0].mxu0
        %646 = vdwg.mxu0
        %v647 = vmul.f32 %v407, %v526
        %v648 = vmul.f32 %v408, %v528
        %v649 = vadd.f32 %v647, %v641
        %v650 = vadd.f32 %v648, %v643
        %651 = vst [vmem:[%s393] sm:$0xff] %v649
        %652 = vst [vmem:[%s393 + $0x8] sm:$0xff] %v650
        %s653 = sand.u32 %s252, 1
        %s654 = scalar_lea.sflag [#allocation5], %s653
        %s655 = sand.u32 %s252, 1
        %s656 = smul.addr %s655, 16
        %s657 = scalar_lea.vmem [#allocation6], %s656
        // Predicated region
        $region61: #{tpu_custom_call.1} parent=55 // pred_check
          %p658 = pneg %p262
        $region62: #{tpu_custom_call.1} parent=55 // pred_check_branch
          %660 = sbr.rel (%p658) target = $region64
        $region63: #{tpu_custom_call.1} parent=55 // pred_region
          %s661 = smul.u32 2, %s32
          %s663 = ssub.s32 256, 256
          %664 = vsyncadd %s654, %s663
          %s665 = smul.addr %s31, 2
          %s666 = sadd.s32 %s661, %s665
          %s667 = smul.addr %s666, 128
          %s668 = scalar_lea.hbm %s9, %s667
          %s670 = sshll.u32 %s657, 4
          %s671 = int_to_ptr.vmem [resolvable:$true] %s670
          %673 = dma.vmem_to_hbm [thread:$0]  %s671, 256, %s668, %s654
        $region64: #{tpu_custom_call.1} parent=55 // pred_fallthru
          _
      $region56: #{tpu_custom_call.1} parent=5 // pred_fallthru
        _
      %p674 = scmp.le.s32.totalorder 2, %s22
      // Predicated region
      $region65: #{tpu_custom_call.1} parent=5 // pred_check
        %p675 = pneg %p674
      $region66: #{tpu_custom_call.1} parent=5 // pred_check_branch
        %677 = sbr.rel (%p675) target = $region68
      $region67: #{tpu_custom_call.1} parent=5 // pred_region
        %s678 = ssub.s32 %s22, 2
        // Predicated region
        $region69: #{tpu_custom_call.1} parent=67 // pred_check
          %p679 = pneg %p268
        $region70: #{tpu_custom_call.1} parent=67 // pred_check_branch
          %681 = sbr.rel (%p679) target = $region72
        $region71: #{tpu_custom_call.1} parent=67 // pred_region
          %s682 = sand.u32 %s253, 1
          %s683 = scalar_lea.sflag [#allocation5], %s682
          %s684 = sand.u32 %s253, 1
          %s685 = smul.addr %s684, 16
          %s686 = scalar_lea.vmem [#allocation6], %s685
          %687 = dma.done %s683, 256
        $region72: #{tpu_custom_call.1} parent=67 // pred_fallthru
          _
      $region68: #{tpu_custom_call.1} parent=5 // pred_fallthru
        _
    $region6: #{tpu_custom_call.1} parent=1 // loop_footer
      %s26 = sadd.s32 1, %s22
    $region7: #{tpu_custom_call.1} parent=1 // loop_footer_branch
      %21 = sbr.rel target = $region3
    $region8: #{tpu_custom_call.1} parent=1 // loop_exit
      _
    %688 = vsyncpa [#allocation4], 1
    %s689 = scalar_lea.sflag [#allocation4], 1
    %690 = vsyncpa %s689, 1
    %691 = vsyncpa [#allocation5], 1
    %s692 = scalar_lea.sflag [#allocation5], 1
    %693 = vsyncpa %s692, 1

</llo_original>
